<compile_context>
chip_gen: v6e
topology: v6e:2x2x1
jax: 0.10.0
libtpu: 0.0.40
codegen_flags: <defaults>
</compile_context>

<pallas_src>
import functools

import jax
import jax.numpy as jnp
from jax import lax
from jax.experimental import pallas as pl
from jax.experimental.pallas import tpu as pltpu


# ----------------------------- helpers ---------------------------------------

def _largest_divisor_at_most(n, cap):
    d = max(1, min(n, cap))
    while n % d:
        d -= 1
    return d


def _round_up(n, m):
    return (n + m - 1) // m * m


def _pick_t_chunk(T, Bp, H, cap=128, scratch_budget_bytes=4 << 20):
    # chunk gate-scratch dominates: rows * 4H * 4 bytes, rows = t_chunk * Bp.
    by_vmem = max(1, scratch_budget_bytes // (Bp * 4 * H * 4))
    return _largest_divisor_at_most(T, min(cap, by_vmem))


# ------------------------- fused LSTM block kernel -----------------------------

def _lstm_block_kernel(x_ref, wih_ref, whh_ref, b_ref, fcw_ref, fcb_ref,
                       out_ref, h_st, c_st, xg_st, hbuf,
                       *, num_layers, hidden, batch_p, t_chunk):
    """One grid step == t_chunk time steps; h_st/c_st persist across the grid.

    x_ref holds the chunk's inputs flattened time-major as (t_chunk*Bp, H), so
    the layer-0 input projection and the fc head are single chunk-level MXU
    matmuls; only the recurrent matmuls live inside the serial time loop.
    """
    H = hidden
    Bp = batch_p
    w_dtype = wih_ref.dtype

    @pl.when(pl.program_id(0) == 0)
    def _init():
        h_st[...] = jnp.zeros_like(h_st)
        c_st[...] = jnp.zeros_like(c_st)

    # (1) layer-0 input projection for the whole chunk: one lane-dense MXU matmul
    #     (t_chunk*Bp, H) @ (H, 4H) + b[0], hoisted out of the serial time loop.
    xg_st[...] = (jnp.dot(x_ref[...].astype(w_dtype), wih_ref[0],
                          preferred_element_type=jnp.float32)
                  + b_ref[0])

    def gate_math(gates, c_prev):
        i_g = jax.nn.sigmoid(gates[:, 0 * H:1 * H])
        f_g = jax.nn.sigmoid(gates[:, 1 * H:2 * H])
        g_g = jnp.tanh(gates[:, 2 * H:3 * H])
        o_g = jax.nn.sigmoid(gates[:, 3 * H:4 * H])
        c_new = f_g * c_prev + i_g * g_g
        h_new = o_g * jnp.tanh(c_new)
        return h_new, c_new

    # (2) serial recurrence over this chunk's time steps.
    @pl.loop(0, t_chunk)
    def _step(t):
        row = pl.multiple_of(t * Bp, Bp)            # Bp is a multiple of 8

        # layer 0: x-part precomputed above, only the recurrent matmul here.
        gates = xg_st[pl.ds(row, Bp), :] + jnp.dot(
            h_st[0].astype(w_dtype), whh_ref[0],
            preferred_element_type=jnp.float32)
        h_new, c_new = gate_math(gates, c_st[0])
        h_st[0] = h_new
        c_st[0] = c_new
        inp = h_new

        for l in range(1, num_layers):              # static unroll over layers
            gates = (jnp.dot(inp.astype(w_dtype), wih_ref[l],
                             preferred_element_type=jnp.float32)
                     + jnp.dot(h_st[l].astype(w_dtype), whh_ref[l],
                               preferred_element_type=jnp.float32)
                     + b_ref[l])
            h_new, c_new = gate_math(gates, c_st[l])
            h_st[l] = h_new
            c_st[l] = c_new
            inp = h_new

        hbuf[pl.ds(row, Bp), :] = inp               # aligned dynamic store

    # (3) fc head for the whole chunk: one (t_chunk*Bp, H) @ (H, C) matmul.
    out_ref[...] = (jnp.dot(hbuf[...].astype(fcw_ref.dtype), fcw_ref[...],
                            preferred_element_type=jnp.float32)
                    + fcb_ref[...]).astype(out_ref.dtype)


# ------------------------------- forward --------------------------------------

def lstm_block_forward(x, params, *, num_layers, weights_dtype=jnp.float32):
    """x: (B, T, H) float32  ->  (B, T, C_OUT) float32 (PyTorch batch_first)."""
    B, T, H = x.shape
    c_out = params["fc_b"].shape[-1]

    # Perf note: pass weights_dtype=jnp.bfloat16 to halve resident weight VMEM
    # and HBM->VMEM DMA bytes (fp32 accumulation kept via
    # preferred_element_type).  Default stays fp32 for the strict 1e-4 check.
    w_ih = params["w_ih"].astype(weights_dtype)
    w_hh = params["w_hh"].astype(weights_dtype)
    fc_w = params["fc_w"].astype(weights_dtype)
    b = params["b"]
    fc_b = params["fc_b"]

    # Pad batch to a sublane multiple so every in-kernel row window is
    # (8,128)-tile aligned.  Padded rows are zeros -> finite gate math, and the
    # padded outputs are sliced away below.
    Bp = _round_up(B, 8)
    if Bp != B:
        x = jnp.pad(x, ((0, Bp - B), (0, 0), (0, 0)))

    # time-major, flattened (T*Bp, H): lane-dense M dim for the chunk matmuls.
    x_flat = jnp.transpose(x, (1, 0, 2)).reshape(T * Bp, H)

    t_chunk = _pick_t_chunk(T, Bp, H)
    n_chunks = T // t_chunk
    rows = t_chunk * Bp

    kernel = functools.partial(_lstm_block_kernel, num_layers=num_layers,
                               hidden=H, batch_p=Bp, t_chunk=t_chunk)

    out_flat = pl.pallas_call(
        kernel,
        out_shape=jax.ShapeDtypeStruct((T * Bp, c_out), jnp.float32),
        grid_spec=pltpu.PrefetchScalarGridSpec(
            num_scalar_prefetch=0,
            grid=(n_chunks,),
            in_specs=[
                pl.BlockSpec((rows, H), lambda i: (i, 0)),                   # x chunk
                pl.BlockSpec((num_layers, H, 4 * H), lambda i: (0, 0, 0)),   # W_ih
                pl.BlockSpec((num_layers, H, 4 * H), lambda i: (0, 0, 0)),   # W_hh
                pl.BlockSpec((num_layers, 1, 4 * H), lambda i: (0, 0, 0)),   # bias
                pl.BlockSpec((H, c_out), lambda i: (0, 0)),                  # fc_w
                pl.BlockSpec((1, c_out), lambda i: (0, 0)),                  # fc_b
            ],
            out_specs=pl.BlockSpec((rows, c_out), lambda i: (i, 0)),
            scratch_shapes=[
                pltpu.VMEM((num_layers, Bp, H), jnp.float32),   # h state
                pltpu.VMEM((num_layers, Bp, H), jnp.float32),   # c state
                pltpu.VMEM((rows, 4 * H), jnp.float32),         # chunk gate pre-acts
                pltpu.VMEM((rows, H), jnp.float32),             # chunk last-layer h
            ],
        ),
        # the recurrence must stay sequential in time -> "arbitrary".
        compiler_params=pltpu.CompilerParams(
            dimension_semantics=("arbitrary",)),
    )(x_flat, w_ih, w_hh, b, fc_w, fc_b)

    out = out_flat.reshape(T, Bp, c_out)[:, :B, :]
    return jnp.transpose(out, (1, 0, 2))


# ----------------------------- pure-JAX reference ------------------------------

def lstm_block_reference(x, params, *, num_layers):
    B, T, H = x.shape

    def step(carry, x_t):
        h, c = carry
        inp = x_t
        hs, cs = [], []
        for l in range(num_layers):
            gates = (inp @ params["w_ih"][l] + h[l] @ params["w_hh"][l]
                     + params["b"][l, 0])
            i_g = jax.nn.sigmoid(gates[:, 0 * H:1 * H])
            f_g = jax.nn.sigmoid(gates[:, 1 * H:2 * H])
            g_g = jnp.tanh(gates[:, 2 * H:3 * H])
            o_g = jax.nn.sigmoid(gates[:, 3 * H:4 * H])
            c_new = f_g * c[l] + i_g * g_g
            h_new = o_g * jnp.tanh(c_new)
            hs.append(h_new)
            cs.append(c_new)
            inp = h_new
        return (jnp.stack(hs), jnp.stack(cs)), inp

    h0 = jnp.zeros((num_layers, B, H), jnp.float32)
    c0 = jnp.zeros((num_layers, B, H), jnp.float32)
    _, outs = lax.scan(step, (h0, c0), jnp.transpose(x, (1, 0, 2)))
    outs = outs @ params["fc_w"] + params["fc_b"][0]            # (T, B, C_OUT)
    return jnp.transpose(outs, (1, 0, 2))


# ----------------------------- parameter init ----------------------------------

def init_params(key, d_model, num_layers, c_out):
    H = d_model
    k = 1.0 / jnp.sqrt(jnp.float32(H))
    keys = jax.random.split(key, 6)
    # PyTorch stores W_ih/W_hh as (4H, in); we keep (in, 4H) so kernels do x @ W.
    # (input_size == hidden_size here, so every layer's W_ih is (H, 4H).)
    w_ih = jax.random.uniform(keys[0], (num_layers, H, 4 * H), jnp.float32, -k, k)
    w_hh = jax.random.uniform(keys[1], (num_layers, H, 4 * H), jnp.float32, -k, k)
    b_ih = jax.random.uniform(keys[2], (num_layers, 1, 4 * H), jnp.float32, -k, k)
    b_hh = jax.random.uniform(keys[3], (num_layers, 1, 4 * H), jnp.float32, -k, k)
    fc_w = jax.random.uniform(keys[4], (H, c_out), jnp.float32, -k, k)
    fc_b = jax.random.uniform(keys[5], (1, c_out), jnp.float32, -k, k)
    return {"w_ih": w_ih, "w_hh": w_hh, "b": b_ih + b_hh,       # biases add linearly
            "fc_w": fc_w, "fc_b": fc_b}


# ----------------------------------- main ---------------------------------------

if __name__ == "__main__":
    B, T, D_MODEL, NUM_LAYERS, C_OUT = 2, 8, 32, 2, 8

    key = jax.random.PRNGKey(0)
    kx, kp = jax.random.split(key)
    x = jax.random.normal(kx, (B, T, D_MODEL), jnp.float32)
    params = init_params(kp, D_MODEL, NUM_LAYERS, C_OUT)

    out = lstm_block_forward(x, params, num_layers=NUM_LAYERS)
    out = jax.block_until_ready(out)

    ref = jax.block_until_ready(
        lstm_block_reference(x, params, num_layers=NUM_LAYERS))

    assert out.shape == (B, T, C_OUT), out.shape
    assert jnp.allclose(out, ref, atol=1e-4, rtol=1e-4), \
        f"max abs err {jnp.max(jnp.abs(out - ref))}"

    print("KERNEL_OK")
</pallas_src>

<mosaic_0001>
module attributes {stable_mosaic.version = 11 : i64} {
  func.func @_lstm_block_kernel(%arg0: i32, %arg1: memref<64x32xf32, #tpu.memory_space<vmem>>, %arg2: memref<2x32x128xf32, #tpu.memory_space<vmem>>, %arg3: memref<2x32x128xf32, #tpu.memory_space<vmem>>, %arg4: memref<2x1x128xf32, #tpu.memory_space<vmem>>, %arg5: memref<32x8xf32, #tpu.memory_space<vmem>>, %arg6: memref<1x8xf32, #tpu.memory_space<vmem>>, %arg7: memref<64x8xf32, #tpu.memory_space<vmem>>, %arg8: memref<2x8x32xf32, #tpu.memory_space<vmem>>, %arg9: memref<2x8x32xf32, #tpu.memory_space<vmem>>, %arg10: memref<64x128xf32, #tpu.memory_space<vmem>>, %arg11: memref<64x32xf32, #tpu.memory_space<vmem>>) attributes {dimension_semantics = [#tpu.dimension_semantics<arbitrary>], iteration_bounds = array<i64: 1>, scalar_prefetch = 0 : i64, scratch_operands = 4 : i64, tpu.core_type = #tpu.core_type<tc>, window_params = [{transform_indices = @transform_0, window_bounds = array<i64: 64, 32>}, {pipeline_mode = #tpu.pipeline_mode<synchronous>, transform_indices = @transform_1, window_bounds = array<i64: 2, 32, 128>}, {pipeline_mode = #tpu.pipeline_mode<synchronous>, transform_indices = @transform_2, window_bounds = array<i64: 2, 32, 128>}, {pipeline_mode = #tpu.pipeline_mode<synchronous>, transform_indices = @transform_3, window_bounds = array<i64: 2, 1, 128>}, {pipeline_mode = #tpu.pipeline_mode<synchronous>, transform_indices = @transform_4, window_bounds = array<i64: 32, 8>}, {pipeline_mode = #tpu.pipeline_mode<synchronous>, transform_indices = @transform_5, window_bounds = array<i64: 1, 8>}, {transform_indices = @transform_6, window_bounds = array<i64: 64, 8>}]} {
    %c0_i32 = arith.constant 0 : i32
    %0 = arith.cmpi eq, %arg0, %c0_i32 : i32
    %1 = arith.extui %0 : i1 to i32
    %c0_i32_0 = arith.constant 0 : i32
    %2 = arith.cmpi ne, %1, %c0_i32_0 : i32
    scf.if %2 {
      %cst_21 = arith.constant 0.000000e+00 : f32
      %20 = vector.broadcast %cst_21 : f32 to vector<2x8x32xf32>
      %c0_22 = arith.constant 0 : index
      %c0_23 = arith.constant 0 : index
      %c0_24 = arith.constant 0 : index
      %21 = vector.load %arg8[%c0_22, %c0_23, %c0_24] : memref<2x8x32xf32, #tpu.memory_space<vmem>>, vector<2x8x32xf32>
      tpu.vector_store %arg8[%c0_22, %c0_23, %c0_24], %20 {strides = array<i32>} : memref<2x8x32xf32, #tpu.memory_space<vmem>>, vector<2x8x32xf32>,
      %cst_25 = arith.constant 0.000000e+00 : f32
      %22 = vector.broadcast %cst_25 : f32 to vector<2x8x32xf32>
      %c0_26 = arith.constant 0 : index
      %c0_27 = arith.constant 0 : index
      %c0_28 = arith.constant 0 : index
      %23 = vector.load %arg9[%c0_26, %c0_27, %c0_28] : memref<2x8x32xf32, #tpu.memory_space<vmem>>, vector<2x8x32xf32>
      tpu.vector_store %arg9[%c0_26, %c0_27, %c0_28], %22 {strides = array<i32>} : memref<2x8x32xf32, #tpu.memory_space<vmem>>, vector<2x8x32xf32>,
    } else {
    }
    %c0 = arith.constant 0 : index
    %c0_1 = arith.constant 0 : index
    %3 = vector.load %arg1[%c0, %c0_1] : memref<64x32xf32, #tpu.memory_space<vmem>>, vector<64x32xf32>
    %c0_2 = arith.constant 0 : index
    %c0_3 = arith.constant 0 : index
    %c0_4 = arith.constant 0 : index
    %4 = vector.load %arg2[%c0_2, %c0_3, %c0_4] : memref<2x32x128xf32, #tpu.memory_space<vmem>>, vector<1x32x128xf32>
    %5 = vector.shape_cast %4 : vector<1x32x128xf32> to vector<32x128xf32>
    %cst = arith.constant dense<0.000000e+00> : vector<64x128xf32>
    %6 = tpu.matmul %3, %5, %cst {dimension_numbers = #tpu.dot_dimension_numbers<[1], [0], [0], [1], [0, 0, 1, 1], [], []>} : vector<64x32xf32>, vector<32x128xf32>, vector<64x128xf32> -> vector<64x128xf32>
    %c0_5 = arith.constant 0 : index
    %c0_6 = arith.constant 0 : index
    %c0_7 = arith.constant 0 : index
    %7 = vector.load %arg4[%c0_5, %c0_6, %c0_7] : memref<2x1x128xf32, #tpu.memory_space<vmem>>, vector<1x1x128xf32>
    %8 = vector.shape_cast %7 : vector<1x1x128xf32> to vector<1x128xf32>
    %9 = vector.broadcast %8 : vector<1x128xf32> to vector<64x128xf32>
    %10 = arith.addf %6, %9 : vector<64x128xf32>
    %c0_8 = arith.constant 0 : index
    %c0_9 = arith.constant 0 : index
    %11 = vector.load %arg10[%c0_8, %c0_9] : memref<64x128xf32, #tpu.memory_space<vmem>>, vector<64x128xf32>
    tpu.vector_store %arg10[%c0_8, %c0_9], %10 {strides = array<i32>} : memref<64x128xf32, #tpu.memory_space<vmem>>, vector<64x128xf32>,
    %c0_i32_10 = arith.constant 0 : i32
    %c8_i32 = arith.constant 8 : i32
    %12 = arith.addi %c0_i32_10, %c8_i32 : i32
    %c1_i32 = arith.constant 1 : i32
    scf.for %arg12 = %c0_i32_10 to %12 step %c1_i32  : i32 {
      %c1_i32_21 = arith.constant 1 : i32
      %20 = arith.muli %arg12, %c1_i32_21 : i32
      %c0_i32_22 = arith.constant 0 : i32
      %21 = arith.addi %c0_i32_22, %20 : i32
      %c8_i32_23 = arith.constant 8 : i32
      %22 = arith.muli %21, %c8_i32_23 : i32
      %23 = tpu.assume_multiple %22, 8 : i32
      %24 = arith.index_cast %23 : i32 to index
      %c0_24 = arith.constant 0 : index
      %25 = vector.load %arg10[%24, %c0_24] : memref<64x128xf32, #tpu.memory_space<vmem>>, vector<8x128xf32>
      %c0_25 = arith.constant 0 : index
      %c0_26 = arith.constant 0 : index
      %c0_27 = arith.constant 0 : index
      %26 = vector.load %arg8[%c0_25, %c0_26, %c0_27] : memref<2x8x32xf32, #tpu.memory_space<vmem>>, vector<1x8x32xf32>
      %27 = vector.shape_cast %26 : vector<1x8x32xf32> to vector<8x32xf32>
      %c0_28 = arith.constant 0 : index
      %c0_29 = arith.constant 0 : index
      %c0_30 = arith.constant 0 : index
      %28 = vector.load %arg3[%c0_28, %c0_29, %c0_30] : memref<2x32x128xf32, #tpu.memory_space<vmem>>, vector<1x32x128xf32>
      %29 = vector.shape_cast %28 : vector<1x32x128xf32> to vector<32x128xf32>
      %cst_31 = arith.constant dense<0.000000e+00> : vector<8x128xf32>
      %30 = tpu.matmul %27, %29, %cst_31 {dimension_numbers = #tpu.dot_dimension_numbers<[1], [0], [0], [1], [0, 0, 1, 1], [], []>} : vector<8x32xf32>, vector<32x128xf32>, vector<8x128xf32> -> vector<8x128xf32>
      %31 = arith.addf %25, %30 : vector<8x128xf32>
      %c0_32 = arith.constant 0 : index
      %c0_33 = arith.constant 0 : index
      %c0_34 = arith.constant 0 : index
      %32 = vector.load %arg9[%c0_32, %c0_33, %c0_34] : memref<2x8x32xf32, #tpu.memory_space<vmem>>, vector<1x8x32xf32>
      %33 = vector.shape_cast %32 : vector<1x8x32xf32> to vector<8x32xf32>
      %34 = vector.extract_strided_slice %31 {offsets = [0, 0], sizes = [8, 32], strides = [1, 1]} : vector<8x128xf32> to vector<8x32xf32>
      %35 = arith.negf %34 : vector<8x32xf32>
      %36 = math.exp %35 : vector<8x32xf32>
      %cst_35 = arith.constant 1.000000e+00 : f32
      %37 = vector.broadcast %cst_35 : f32 to vector<8x32xf32>
      %38 = arith.addf %37, %36 : vector<8x32xf32>
      %39 = arith.divf %37, %38 : vector<8x32xf32>
      %40 = vector.extract_strided_slice %31 {offsets = [0, 32], sizes = [8, 32], strides = [1, 1]} : vector<8x128xf32> to vector<8x32xf32>
      %41 = arith.negf %40 : vector<8x32xf32>
      %42 = math.exp %41 : vector<8x32xf32>
      %cst_36 = arith.constant 1.000000e+00 : f32
      %43 = vector.broadcast %cst_36 : f32 to vector<8x32xf32>
      %44 = arith.addf %43, %42 : vector<8x32xf32>
      %45 = arith.divf %43, %44 : vector<8x32xf32>
      %46 = vector.extract_strided_slice %31 {offsets = [0, 64], sizes = [8, 32], strides = [1, 1]} : vector<8x128xf32> to vector<8x32xf32>
      %47 = math.tanh %46 : vector<8x32xf32>
      %48 = vector.extract_strided_slice %31 {offsets = [0, 96], sizes = [8, 32], strides = [1, 1]} : vector<8x128xf32> to vector<8x32xf32>
      %49 = arith.negf %48 : vector<8x32xf32>
      %50 = math.exp %49 : vector<8x32xf32>
      %cst_37 = arith.constant 1.000000e+00 : f32
      %51 = vector.broadcast %cst_37 : f32 to vector<8x32xf32>
      %52 = arith.addf %51, %50 : vector<8x32xf32>
      %53 = arith.divf %51, %52 : vector<8x32xf32>
      %54 = arith.mulf %45, %33 : vector<8x32xf32>
      %55 = arith.mulf %39, %47 : vector<8x32xf32>
      %56 = arith.addf %54, %55 : vector<8x32xf32>
      %57 = math.tanh %56 : vector<8x32xf32>
      %58 = arith.mulf %53, %57 : vector<8x32xf32>
      %c0_38 = arith.constant 0 : index
      %c0_39 = arith.constant 0 : index
      %c0_40 = arith.constant 0 : index
      %59 = vector.load %arg8[%c0_38, %c0_39, %c0_40] : memref<2x8x32xf32, #tpu.memory_space<vmem>>, vector<1x8x32xf32>
      %60 = vector.shape_cast %59 : vector<1x8x32xf32> to vector<8x32xf32>
      %61 = vector.shape_cast %58 : vector<8x32xf32> to vector<1x8x32xf32>
      tpu.vector_store %arg8[%c0_38, %c0_39, %c0_40], %61 {strides = array<i32>} : memref<2x8x32xf32, #tpu.memory_space<vmem>>, vector<1x8x32xf32>,
      %c0_41 = arith.constant 0 : index
      %c0_42 = arith.constant 0 : index
      %c0_43 = arith.constant 0 : index
      %62 = vector.load %arg9[%c0_41, %c0_42, %c0_43] : memref<2x8x32xf32, #tpu.memory_space<vmem>>, vector<1x8x32xf32>
      %63 = vector.shape_cast %62 : vector<1x8x32xf32> to vector<8x32xf32>
      %64 = vector.shape_cast %56 : vector<8x32xf32> to vector<1x8x32xf32>
      tpu.vector_store %arg9[%c0_41, %c0_42, %c0_43], %64 {strides = array<i32>} : memref<2x8x32xf32, #tpu.memory_space<vmem>>, vector<1x8x32xf32>,
      %c1 = arith.constant 1 : index
      %c0_44 = arith.constant 0 : index
      %c0_45 = arith.constant 0 : index
      %65 = vector.load %arg2[%c1, %c0_44, %c0_45] : memref<2x32x128xf32, #tpu.memory_space<vmem>>, vector<1x32x128xf32>
      %66 = vector.shape_cast %65 : vector<1x32x128xf32> to vector<32x128xf32>
      %cst_46 = arith.constant dense<0.000000e+00> : vector<8x128xf32>
      %67 = tpu.matmul %58, %66, %cst_46 {dimension_numbers = #tpu.dot_dimension_numbers<[1], [0], [0], [1], [0, 0, 1, 1], [], []>} : vector<8x32xf32>, vector<32x128xf32>, vector<8x128xf32> -> vector<8x128xf32>
      %c1_47 = arith.constant 1 : index
      %c0_48 = arith.constant 0 : index
      %c0_49 = arith.constant 0 : index
      %68 = vector.load %arg8[%c1_47, %c0_48, %c0_49] : memref<2x8x32xf32, #tpu.memory_space<vmem>>, vector<1x8x32xf32>
      %69 = vector.shape_cast %68 : vector<1x8x32xf32> to vector<8x32xf32>
      %c1_50 = arith.constant 1 : index
      %c0_51 = arith.constant 0 : index
      %c0_52 = arith.constant 0 : index
      %70 = vector.load %arg3[%c1_50, %c0_51, %c0_52] : memref<2x32x128xf32, #tpu.memory_space<vmem>>, vector<1x32x128xf32>
      %71 = vector.shape_cast %70 : vector<1x32x128xf32> to vector<32x128xf32>
      %cst_53 = arith.constant dense<0.000000e+00> : vector<8x128xf32>
      %72 = tpu.matmul %69, %71, %cst_53 {dimension_numbers = #tpu.dot_dimension_numbers<[1], [0], [0], [1], [0, 0, 1, 1], [], []>} : vector<8x32xf32>, vector<32x128xf32>, vector<8x128xf32> -> vector<8x128xf32>
      %73 = arith.addf %67, %72 : vector<8x128xf32>
      %c1_54 = arith.constant 1 : index
      %c0_55 = arith.constant 0 : index
      %c0_56 = arith.constant 0 : index
      %74 = vector.load %arg4[%c1_54, %c0_55, %c0_56] : memref<2x1x128xf32, #tpu.memory_space<vmem>>, vector<1x1x128xf32>
      %75 = vector.shape_cast %74 : vector<1x1x128xf32> to vector<1x128xf32>
      %76 = vector.broadcast %75 : vector<1x128xf32> to vector<8x128xf32>
      %77 = arith.addf %73, %76 : vector<8x128xf32>
      %c1_57 = arith.constant 1 : index
      %c0_58 = arith.constant 0 : index
      %c0_59 = arith.constant 0 : index
      %78 = vector.load %arg9[%c1_57, %c0_58, %c0_59] : memref<2x8x32xf32, #tpu.memory_space<vmem>>, vector<1x8x32xf32>
      %79 = vector.shape_cast %78 : vector<1x8x32xf32> to vector<8x32xf32>
      %80 = vector.extract_strided_slice %77 {offsets = [0, 0], sizes = [8, 32], strides = [1, 1]} : vector<8x128xf32> to vector<8x32xf32>
      %81 = arith.negf %80 : vector<8x32xf32>
      %82 = math.exp %81 : vector<8x32xf32>
      %cst_60 = arith.constant 1.000000e+00 : f32
      %83 = vector.broadcast %cst_60 : f32 to vector<8x32xf32>
      %84 = arith.addf %83, %82 : vector<8x32xf32>
      %85 = arith.divf %83, %84 : vector<8x32xf32>
      %86 = vector.extract_strided_slice %77 {offsets = [0, 32], sizes = [8, 32], strides = [1, 1]} : vector<8x128xf32> to vector<8x32xf32>
      %87 = arith.negf %86 : vector<8x32xf32>
      %88 = math.exp %87 : vector<8x32xf32>
      %cst_61 = arith.constant 1.000000e+00 : f32
      %89 = vector.broadcast %cst_61 : f32 to vector<8x32xf32>
      %90 = arith.addf %89, %88 : vector<8x32xf32>
      %91 = arith.divf %89, %90 : vector<8x32xf32>
      %92 = vector.extract_strided_slice %77 {offsets = [0, 64], sizes = [8, 32], strides = [1, 1]} : vector<8x128xf32> to vector<8x32xf32>
      %93 = math.tanh %92 : vector<8x32xf32>
      %94 = vector.extract_strided_slice %77 {offsets = [0, 96], sizes = [8, 32], strides = [1, 1]} : vector<8x128xf32> to vector<8x32xf32>
      %95 = arith.negf %94 : vector<8x32xf32>
      %96 = math.exp %95 : vector<8x32xf32>
      %cst_62 = arith.constant 1.000000e+00 : f32
      %97 = vector.broadcast %cst_62 : f32 to vector<8x32xf32>
      %98 = arith.addf %97, %96 : vector<8x32xf32>
      %99 = arith.divf %97, %98 : vector<8x32xf32>
      %100 = arith.mulf %91, %79 : vector<8x32xf32>
      %101 = arith.mulf %85, %93 : vector<8x32xf32>
      %102 = arith.addf %100, %101 : vector<8x32xf32>
      %103 = math.tanh %102 : vector<8x32xf32>
      %104 = arith.mulf %99, %103 : vector<8x32xf32>
      %c1_63 = arith.constant 1 : index
      %c0_64 = arith.constant 0 : index
      %c0_65 = arith.constant 0 : index
      %105 = vector.load %arg8[%c1_63, %c0_64, %c0_65] : memref<2x8x32xf32, #tpu.memory_space<vmem>>, vector<1x8x32xf32>
      %106 = vector.shape_cast %105 : vector<1x8x32xf32> to vector<8x32xf32>
      %107 = vector.shape_cast %104 : vector<8x32xf32> to vector<1x8x32xf32>
      tpu.vector_store %arg8[%c1_63, %c0_64, %c0_65], %107 {strides = array<i32>} : memref<2x8x32xf32, #tpu.memory_space<vmem>>, vector<1x8x32xf32>,
      %c1_66 = arith.constant 1 : index
      %c0_67 = arith.constant 0 : index
      %c0_68 = arith.constant 0 : index
      %108 = vector.load %arg9[%c1_66, %c0_67, %c0_68] : memref<2x8x32xf32, #tpu.memory_space<vmem>>, vector<1x8x32xf32>
      %109 = vector.shape_cast %108 : vector<1x8x32xf32> to vector<8x32xf32>
      %110 = vector.shape_cast %102 : vector<8x32xf32> to vector<1x8x32xf32>
      tpu.vector_store %arg9[%c1_66, %c0_67, %c0_68], %110 {strides = array<i32>} : memref<2x8x32xf32, #tpu.memory_space<vmem>>, vector<1x8x32xf32>,
      %111 = arith.index_cast %23 : i32 to index
      %c0_69 = arith.constant 0 : index
      %112 = vector.load %arg11[%111, %c0_69] : memref<64x32xf32, #tpu.memory_space<vmem>>, vector<8x32xf32>
      tpu.vector_store %arg11[%111, %c0_69], %104 {strides = array<i32>} : memref<64x32xf32, #tpu.memory_space<vmem>>, vector<8x32xf32>,
    }
    %c8_i32_11 = arith.constant 8 : i32
    %c0_12 = arith.constant 0 : index
    %c0_13 = arith.constant 0 : index
    %13 = vector.load %arg11[%c0_12, %c0_13] : memref<64x32xf32, #tpu.memory_space<vmem>>, vector<64x32xf32>
    %c0_14 = arith.constant 0 : index
    %c0_15 = arith.constant 0 : index
    %14 = vector.load %arg5[%c0_14, %c0_15] : memref<32x8xf32, #tpu.memory_space<vmem>>, vector<32x8xf32>
    %cst_16 = arith.constant dense<0.000000e+00> : vector<64x8xf32>
    %15 = tpu.matmul %13, %14, %cst_16 {dimension_numbers = #tpu.dot_dimension_numbers<[1], [0], [0], [1], [0, 0, 1, 1], [], []>} : vector<64x32xf32>, vector<32x8xf32>, vector<64x8xf32> -> vector<64x8xf32>
    %c0_17 = arith.constant 0 : index
    %c0_18 = arith.constant 0 : index
    %16 = vector.load %arg6[%c0_17, %c0_18] : memref<1x8xf32, #tpu.memory_space<vmem>>, vector<1x8xf32>
    %17 = vector.broadcast %16 : vector<1x8xf32> to vector<64x8xf32>
    %18 = arith.addf %15, %17 : vector<64x8xf32>
    %c0_19 = arith.constant 0 : index
    %c0_20 = arith.constant 0 : index
    %19 = vector.load %arg7[%c0_19, %c0_20] : memref<64x8xf32, #tpu.memory_space<vmem>>, vector<64x8xf32>
    tpu.vector_store %arg7[%c0_19, %c0_20], %18 {strides = array<i32>} : memref<64x8xf32, #tpu.memory_space<vmem>>, vector<64x8xf32>,
    return
  }
  func.func @transform_0(%arg0: i32) -> (i32, i32) {
    %c0_i32 = arith.constant 0 : i32
    %c0_i32_0 = arith.constant 0 : i32
    return %arg0, %c0_i32 : i32, i32
  }
  func.func @transform_1(%arg0: i32) -> (i32, i32, i32) {
    %c0_i32 = arith.constant 0 : i32
    %c0_i32_0 = arith.constant 0 : i32
    %c0_i32_1 = arith.constant 0 : i32
    %c0_i32_2 = arith.constant 0 : i32
    return %c0_i32, %c0_i32_0, %c0_i32_1 : i32, i32, i32
  }
  func.func @transform_2(%arg0: i32) -> (i32, i32, i32) {
    %c0_i32 = arith.constant 0 : i32
    %c0_i32_0 = arith.constant 0 : i32
    %c0_i32_1 = arith.constant 0 : i32
    %c0_i32_2 = arith.constant 0 : i32
    return %c0_i32, %c0_i32_0, %c0_i32_1 : i32, i32, i32
  }
  func.func @transform_3(%arg0: i32) -> (i32, i32, i32) {
    %c0_i32 = arith.constant 0 : i32
    %c0_i32_0 = arith.constant 0 : i32
    %c0_i32_1 = arith.constant 0 : i32
    %c0_i32_2 = arith.constant 0 : i32
    return %c0_i32, %c0_i32_0, %c0_i32_1 : i32, i32, i32
  }
  func.func @transform_4(%arg0: i32) -> (i32, i32) {
    %c0_i32 = arith.constant 0 : i32
    %c0_i32_0 = arith.constant 0 : i32
    %c0_i32_1 = arith.constant 0 : i32
    return %c0_i32, %c0_i32_0 : i32, i32
  }
  func.func @transform_5(%arg0: i32) -> (i32, i32) {
    %c0_i32 = arith.constant 0 : i32
    %c0_i32_0 = arith.constant 0 : i32
    %c0_i32_1 = arith.constant 0 : i32
    return %c0_i32, %c0_i32_0 : i32, i32
  }
  func.func @transform_6(%arg0: i32) -> (i32, i32) {
    %c0_i32 = arith.constant 0 : i32
    %c0_i32_0 = arith.constant 0 : i32
    return %arg0, %c0_i32 : i32, i32
  }
}

</mosaic_0001>

<llo_original>
// kernel: tpu_custom_call.1
$region0: #{tpu_custom_call.1}
  #allocation0 [shape = 'u32[]', space=smem, size = 0x4, offset = 0x4, fixed_abs, tag = 'smem constant byte address 0x4 - core index']
  #allocation1 [shape = 'u32[144,128]{1,0:T(1,128)}', space=vmem, size = 0x12000, scoped, tag = 'internal scratch']
  #allocation2 [shape = 'f32[2,8,32]{2,1,0:T(8,128)}', space=vmem, size = 0x2000, scoped, tag = 'scratch operand']
  #allocation3 [shape = 'f32[2,8,32]{2,1,0:T(8,128)}', space=vmem, size = 0x2000, scoped, tag = 'scratch operand']
  #allocation4 [shape = 'f32[64,128]{1,0:T(8,128)}', space=vmem, size = 0x8000, scoped, tag = 'scratch operand']
  #allocation5 [shape = 'f32[64,32]{1,0:T(8,128)}', space=vmem, size = 0x8000, scoped, tag = 'scratch operand']
  %s0 = inlined_call_operand.vmem [shape: f32[64,32], index: 0, kind: input, shape index: {}]
  %s1 = inlined_call_operand.vmem [shape: f32[2,32,128], index: 1, kind: input, shape index: {}]
  %s2 = inlined_call_operand.vmem [shape: f32[2,32,128], index: 2, kind: input, shape index: {}]
  %s3 = inlined_call_operand.vmem [shape: f32[2,1,128], index: 3, kind: input, shape index: {}]
  %s4 = inlined_call_operand.vmem [shape: f32[32,8], index: 4, kind: input, shape index: {}]
  %s5 = inlined_call_operand.vmem [shape: f32[1,8], index: 5, kind: input, shape index: {}]
  %s6 = inlined_call_operand.vmem [shape: f32[64,8], index: 6, kind: output, shape index: {}]
  %s7 = sld [smem:[#allocation0]]
  $region45: #{tpu_custom_call.1} parent=0
    _
  %s9 = ssub.s32 1, %s7
  %s10 = scalar_select 0, %s9, %s7
  // Predicated region
  $region2: #{tpu_custom_call.1} parent=0 // pred_check
    _
  $region3: #{tpu_custom_call.1} parent=0 // pred_check_branch
    %12 = sbr.rel (0) target = $region5
  $region4: #{tpu_custom_call.1} parent=0 // pred_region
    _
  $region5: #{tpu_custom_call.1} parent=0 // pred_fallthru
    _
  // Predicated region
  $region6: #{tpu_custom_call.1} parent=0 // pred_check
    _
  $region7: #{tpu_custom_call.1} parent=0 // pred_check_branch
    %14 = sbr.rel (0) target = $region9
  $region8: #{tpu_custom_call.1} parent=0 // pred_region
    _
  $region9: #{tpu_custom_call.1} parent=0 // pred_fallthru
    _
  // Predicated region
  $region10: #{tpu_custom_call.1} parent=0 // pred_check
    _
  $region11: #{tpu_custom_call.1} parent=0 // pred_check_branch
    %16 = sbr.rel (0) target = $region13
  $region12: #{tpu_custom_call.1} parent=0 // pred_region
    _
  $region13: #{tpu_custom_call.1} parent=0 // pred_fallthru
    _
  // Predicated region
  $region14: #{tpu_custom_call.1} parent=0 // pred_check
    _
  $region15: #{tpu_custom_call.1} parent=0 // pred_check_branch
    %18 = sbr.rel (0) target = $region17
  $region16: #{tpu_custom_call.1} parent=0 // pred_region
    _
  $region17: #{tpu_custom_call.1} parent=0 // pred_fallthru
    _
  // Predicated region
  $region18: #{tpu_custom_call.1} parent=0 // pred_check
    _
  $region19: #{tpu_custom_call.1} parent=0 // pred_check_branch
    %20 = sbr.rel (0) target = $region21
  $region20: #{tpu_custom_call.1} parent=0 // pred_region
    _
  $region21: #{tpu_custom_call.1} parent=0 // pred_fallthru
    _
  // Predicated region
  $region22: #{tpu_custom_call.1} parent=0 // pred_check
    _
  $region23: #{tpu_custom_call.1} parent=0 // pred_check_branch
    %22 = sbr.rel (0) target = $region25
  $region24: #{tpu_custom_call.1} parent=0 // pred_region
    _
  $region25: #{tpu_custom_call.1} parent=0 // pred_fallthru
    _
  %p23 = scmp.eq.s32.totalorder 0, 0
  // Predicated region
  $region26: #{tpu_custom_call.1} parent=0 // pred_check
    %p24 = pneg %p23
  $region27: #{tpu_custom_call.1} parent=0 // pred_check_branch
    %26 = sbr.rel (%p24) target = $region29
  $region28: #{tpu_custom_call.1} parent=0 // pred_region
    %vm27 = vcmask 261120
    %28 = vst.msk [vmem:[#allocation2] sm:$0xff] %vm27, 0.0
    %29 = vst.msk [vmem:[#allocation2 + $0x8] sm:$0xff] %vm27, 0.0
    %30 = vst.msk [vmem:[#allocation3] sm:$0xff] %vm27, 0.0
    %31 = vst.msk [vmem:[#allocation3 + $0x8] sm:$0xff] %vm27, 0.0
  $region29: #{tpu_custom_call.1} parent=0 // pred_fallthru
    _
  %v32 = vld [vmem:[%s0] sm:$0xff]
  %v33 = vld [vmem:[%s0 + $0x8] sm:$0xff]
  %v34 = vld [vmem:[%s0 + $0x10] sm:$0xff]
  %v35 = vld [vmem:[%s0 + $0x18] sm:$0xff]
  %v36 = vld [vmem:[%s0 + $0x20] sm:$0xff]
  %v37 = vld [vmem:[%s0 + $0x28] sm:$0xff]
  %v38 = vld [vmem:[%s0 + $0x30] sm:$0xff]
  %v39 = vld [vmem:[%s0 + $0x38] sm:$0xff]
  %v40 = vld [vmem:[%s1] sm:$0xff]
  %v41 = vld [vmem:[%s1 + $0x8] sm:$0xff]
  %v42 = vld [vmem:[%s1 + $0x10] sm:$0xff]
  %v43 = vld [vmem:[%s1 + $0x18] sm:$0xff]
  %v44 = vld [vmem:[%s3] sm:$0x1]
  %v46 = vlaneseq
  %v47 = vshrl.u32 %v46, 7
  %v48 = vsub.s32 0, %v47
  %v49 = vrot.slane %v44, %v48
  %vm51 = vcmask 261120
  %v53 = vsel %vm51, %v32, 0
  %v56 = vsel %vm51, %v33, 0
  %v59 = vsel %vm51, %v34, 0
  %v62 = vsel %vm51, %v35, 0
  %v65 = vsel %vm51, %v36, 0
  %v68 = vsel %vm51, %v37, 0
  %v71 = vsel %vm51, %v38, 0
  %v74 = vsel %vm51, %v39, 0
  %76 = vmatprep.subr.mxu0 0.0
  %77 = vmatpush1.msra.mxu0 0.0
  %78 = vmatprep.subr.mxu0 0.0
  %79 = vmatpush1.msra.mxu0 0.0
  %80 = vmatprep.subr.mxu0 0.0
  %81 = vmatpush1.msra.mxu0 0.0
  %82 = vmatprep.subr.mxu0 0.0
  %83 = vmatpush1.msra.mxu0 0.0
  %84 = vmatprep.subr.mxu0 0.0
  %85 = vmatpush1.msra.mxu0 0.0
  %86 = vmatprep.subr.mxu0 0.0
  %87 = vmatpush1.msra.mxu0 0.0
  %88 = vmatprep.subr.mxu0 0.0
  %89 = vmatpush1.msra.mxu0 0.0
  %90 = vmatprep.subr.mxu0 0.0
  %91 = vmatpush1.msra.mxu0 0.0
  %92 = vmatprep.subr.mxu0 0.0
  %93 = vmatpush1.msra.mxu0 0.0
  %94 = vmatprep.subr.mxu0 0.0
  %95 = vmatpush1.msra.mxu0 0.0
  %96 = vmatprep.subr.mxu0 0.0
  %97 = vmatpush1.msra.mxu0 0.0
  %98 = vmatprep.subr.mxu0 0.0
  %99 = vmatpush1.msra.mxu0 0.0
  %100 = vmatprep.subr.mxu0 0.0
  %101 = vmatpush1.msra.mxu0 %v43
  %102 = vmatprep.subr.mxu0 0.0
  %103 = vmatpush1.msra.mxu0 %v42
  %104 = vmatprep.subr.mxu0 0.0
  %105 = vmatpush1.msra.mxu0 %v41
  %106 = vmatprep.subr.mxu0 0.0
  %107 = vmatpush1.msra.mxu0 %v40
  %108 = vmatprep.subr.mxu0 0.0
  %109 = vmatpush2.msra.mxu0 0.0
  %110 = vmatprep.subr.mxu0 0.0
  %111 = vmatpush2.msra.mxu0 0.0
  %112 = vmatprep.subr.mxu0 0.0
  %113 = vmatpush2.msra.mxu0 0.0
  %114 = vmatprep.subr.mxu0 0.0
  %115 = vmatpush2.msra.mxu0 0.0
  %116 = vmatprep.subr.mxu0 0.0
  %117 = vmatpush2.msra.mxu0 0.0
  %118 = vmatprep.subr.mxu0 0.0
  %119 = vmatpush2.msra.mxu0 0.0
  %120 = vmatprep.subr.mxu0 0.0
  %121 = vmatpush2.msra.mxu0 0.0
  %122 = vmatprep.subr.mxu0 0.0
  %123 = vmatpush2.msra.mxu0 0.0
  %124 = vmatprep.subr.mxu0 0.0
  %125 = vmatpush2.msra.mxu0 0.0
  %126 = vmatprep.subr.mxu0 0.0
  %127 = vmatpush2.msra.mxu0 0.0
  %128 = vmatprep.subr.mxu0 0.0
  %129 = vmatpush2.msra.mxu0 0.0
  %130 = vmatprep.subr.mxu0 0.0
  %131 = vmatpush2.msra.mxu0 0.0
  %132 = vmatprep.subr.mxu0 0.0
  %133 = vmatpush2.msra.mxu0 0.0
  %134 = vmatprep.subr.mxu0 0.0
  %135 = vmatpush2.msra.mxu0 0.0
  %136 = vmatprep.subr.mxu0 0.0
  %137 = vmatpush2.msra.mxu0 0.0
  %138 = vmatprep.subr.mxu0 0.0
  %139 = vmatpush2.msra.mxu0 0.0
  %140 = vmatprep.mubr.f32.mxu0 0.0
  %141 = vmatmul.mubr.f32.gmra.mxu0 %v53
  %v142 = vpop.f32.mrf.mxu0
  %v143 = vadd.f32 %v49, %v142
  %v144 = vpop.f32.mrf.mxu0
  %145 = vmatprep.mubr.f32.mxu0 0.0
  %146 = vmatmul.mubr.f32.gmra.mxu0 %v56
  %v147 = vpop.f32.mrf.mxu0
  %v148 = vadd.f32 %v49, %v147
  %v149 = vpop.f32.mrf.mxu0
  %150 = vmatprep.mubr.f32.mxu0 0.0
  %151 = vmatmul.mubr.f32.gmra.mxu0 %v59
  %v152 = vpop.f32.mrf.mxu0
  %v153 = vadd.f32 %v49, %v152
  %v154 = vpop.f32.mrf.mxu0
  %155 = vmatprep.mubr.f32.mxu0 0.0
  %156 = vmatmul.mubr.f32.gmra.mxu0 %v62
  %v157 = vpop.f32.mrf.mxu0
  %v158 = vadd.f32 %v49, %v157
  %v159 = vpop.f32.mrf.mxu0
  %160 = vmatprep.mubr.f32.mxu0 0.0
  %161 = vmatmul.mubr.f32.gmra.mxu0 %v65
  %v162 = vpop.f32.mrf.mxu0
  %v163 = vadd.f32 %v49, %v162
  %v164 = vpop.f32.mrf.mxu0
  %165 = vmatprep.mubr.f32.mxu0 0.0
  %166 = vmatmul.mubr.f32.gmra.mxu0 %v68
  %v167 = vpop.f32.mrf.mxu0
  %v168 = vadd.f32 %v49, %v167
  %v169 = vpop.f32.mrf.mxu0
  %170 = vmatprep.mubr.f32.mxu0 0.0
  %171 = vmatmul.mubr.f32.gmra.mxu0 %v71
  %v172 = vpop.f32.mrf.mxu0
  %v173 = vadd.f32 %v49, %v172
  %v174 = vpop.f32.mrf.mxu0
  %175 = vmatprep.mubr.f32.mxu0 0.0
  %176 = vmatmul.mubr.f32.gmra.mxu0 %v74
  %v177 = vpop.f32.mrf.mxu0
  %v178 = vadd.f32 %v49, %v177
  %v179 = vpop.f32.mrf.mxu0
  %180 = vdwg.mxu0
  %181 = vst [vmem:[#allocation4] sm:$0xff] %v143
  %182 = vst [vmem:[#allocation4 + $0x8] sm:$0xff] %v148
  %183 = vst [vmem:[#allocation4 + $0x10] sm:$0xff] %v153
  %184 = vst [vmem:[#allocation4 + $0x18] sm:$0xff] %v158
  %185 = vst [vmem:[#allocation4 + $0x20] sm:$0xff] %v163
  %186 = vst [vmem:[#allocation4 + $0x28] sm:$0xff] %v168
  %187 = vst [vmem:[#allocation4 + $0x30] sm:$0xff] %v173
  %188 = vst [vmem:[#allocation4 + $0x38] sm:$0xff] %v178
  loop: start=0, step=1, limit=8
  $region30: #{tpu_custom_call.1} parent=0 // loop_pre_header
    _
  $region31: #{tpu_custom_call.1} parent=0 // loop_header
    %s190 = sphi 0, %s194
    %p191 = scmp.ge.s32.totalorder %s190, 8
  $region32: #{tpu_custom_call.1} parent=0 // loop_header_branch
    %193 = sbr.rel (%p191) target = $region36
  $region33: #{tpu_custom_call.1} parent=0 // loop_body
    %s195 = smul.u32 %s190, 8
    %s196 = scalar_lea.vmem [#allocation4], %s195
    %v197 = vld [vmem:[%s196] sm:$0xff]
    %v198 = vld [vmem:[#allocation2] sm:$0xff]
    %v199 = vld [vmem:[%s2] sm:$0xff]
    %v200 = vld [vmem:[%s2 + $0x8] sm:$0xff]
    %v201 = vld [vmem:[%s2 + $0x10] sm:$0xff]
    %v202 = vld [vmem:[%s2 + $0x18] sm:$0xff]
    %v204 = vsel %vm51, %v198, 0
    %206 = vmatprep.subr.mxu0 0.0
    %207 = vmatpush1.msra.mxu0 0.0
    %208 = vmatprep.subr.mxu0 0.0
    %209 = vmatpush1.msra.mxu0 0.0
    %210 = vmatprep.subr.mxu0 0.0
    %211 = vmatpush1.msra.mxu0 0.0
    %212 = vmatprep.subr.mxu0 0.0
    %213 = vmatpush1.msra.mxu0 0.0
    %214 = vmatprep.subr.mxu0 0.0
    %215 = vmatpush1.msra.mxu0 0.0
    %216 = vmatprep.subr.mxu0 0.0
    %217 = vmatpush1.msra.mxu0 0.0
    %218 = vmatprep.subr.mxu0 0.0
    %219 = vmatpush1.msra.mxu0 0.0
    %220 = vmatprep.subr.mxu0 0.0
    %221 = vmatpush1.msra.mxu0 0.0
    %222 = vmatprep.subr.mxu0 0.0
    %223 = vmatpush1.msra.mxu0 0.0
    %224 = vmatprep.subr.mxu0 0.0
    %225 = vmatpush1.msra.mxu0 0.0
    %226 = vmatprep.subr.mxu0 0.0
    %227 = vmatpush1.msra.mxu0 0.0
    %228 = vmatprep.subr.mxu0 0.0
    %229 = vmatpush1.msra.mxu0 0.0
    %230 = vmatprep.subr.mxu0 0.0
    %231 = vmatpush1.msra.mxu0 %v202
    %232 = vmatprep.subr.mxu0 0.0
    %233 = vmatpush1.msra.mxu0 %v201
    %234 = vmatprep.subr.mxu0 0.0
    %235 = vmatpush1.msra.mxu0 %v200
    %236 = vmatprep.subr.mxu0 0.0
    %237 = vmatpush1.msra.mxu0 %v199
    %238 = vmatprep.subr.mxu0 0.0
    %239 = vmatpush2.msra.mxu0 0.0
    %240 = vmatprep.subr.mxu0 0.0
    %241 = vmatpush2.msra.mxu0 0.0
    %242 = vmatprep.subr.mxu0 0.0
    %243 = vmatpush2.msra.mxu0 0.0
    %244 = vmatprep.subr.mxu0 0.0
    %245 = vmatpush2.msra.mxu0 0.0
    %246 = vmatprep.subr.mxu0 0.0
    %247 = vmatpush2.msra.mxu0 0.0
    %248 = vmatprep.subr.mxu0 0.0
    %249 = vmatpush2.msra.mxu0 0.0
    %250 = vmatprep.subr.mxu0 0.0
    %251 = vmatpush2.msra.mxu0 0.0
    %252 = vmatprep.subr.mxu0 0.0
    %253 = vmatpush2.msra.mxu0 0.0
    %254 = vmatprep.subr.mxu0 0.0
    %255 = vmatpush2.msra.mxu0 0.0
    %256 = vmatprep.subr.mxu0 0.0
    %257 = vmatpush2.msra.mxu0 0.0
    %258 = vmatprep.subr.mxu0 0.0
    %259 = vmatpush2.msra.mxu0 0.0
    %260 = vmatprep.subr.mxu0 0.0
    %261 = vmatpush2.msra.mxu0 0.0
    %262 = vmatprep.subr.mxu0 0.0
    %263 = vmatpush2.msra.mxu0 0.0
    %264 = vmatprep.subr.mxu0 0.0
    %265 = vmatpush2.msra.mxu0 0.0
    %266 = vmatprep.subr.mxu0 0.0
    %267 = vmatpush2.msra.mxu0 0.0
    %268 = vmatprep.subr.mxu0 0.0
    %269 = vmatpush2.msra.mxu0 0.0
    %270 = vmatprep.mubr.f32.mxu0 0.0
    %271 = vmatmul.mubr.f32.gmra.mxu0 %v204
    %v272 = vpop.f32.mrf.mxu0
    %v273 = vadd.f32 0.0, %v272
    %v274 = vpop.f32.mrf.mxu0
    %275 = vdwg.mxu0
    %v276 = vadd.f32 %v197, %v273
    %v277 = vld [vmem:[#allocation3] sm:$0xff]
    %v278 = vxor.u32 %v276, 2147483648
    %v279 = vmul.f32 %v278, 1.442695
    %v280 = vpow.pop %v279
    %v281 = vadd.f32 %v280, 1.0
    %v282 = vrcp.pop %v281
    %v283 = vmul.f32 1.0, %v282
    %v284 = vtanh.pop %v276
    %286 = vrot.lane.b32.xlu0 %v277, 32
    %v287 = vpop.permute.xlu0 %286
    %v289 = vmul.f32 %v283, %v287
    %291 = vrot.lane.b32.xlu0 %v284, 64
    %v292 = vpop.permute.xlu0 %291
    %v294 = vmul.f32 %v283, %v292
    %296 = vrot.lane.b32.xlu0 %v294, 32
    %v297 = vpop.permute.xlu0 %296
    %v299 = vadd.f32 %v289, %v297
    %v300 = vtanh.pop %v299
    %302 = vrot.lane.b32.xlu0 %v300, 64
    %v303 = vpop.permute.xlu0 %302
    %v305 = vmul.f32 %v283, %v303
    %307 = vrot.lane.b32.xlu0 %v305, 32
    %v308 = vpop.permute.xlu0 %307
    %310 = vst.msk [vmem:[#allocation2] sm:$0xff] %vm51, %v308
    %312 = vrot.lane.b32.xlu0 %v299, 96
    %v313 = vpop.permute.xlu0 %312
    %315 = vst.msk [vmem:[#allocation3] sm:$0xff] %vm51, %v313
    %s316 = scalar_lea.vmem %s1, 32
    %v317 = vld [vmem:[%s316] sm:$0xff]
    %v318 = vld [vmem:[%s316 + $0x8] sm:$0xff]
    %v319 = vld [vmem:[%s316 + $0x10] sm:$0xff]
    %v320 = vld [vmem:[%s316 + $0x18] sm:$0xff]
    %s321 = scalar_lea.vmem [#allocation2], 8
    %v322 = vld [vmem:[%s321] sm:$0xff]
    %s323 = scalar_lea.vmem %s2, 32
    %v324 = vld [vmem:[%s323] sm:$0xff]
    %v325 = vld [vmem:[%s323 + $0x8] sm:$0xff]
    %v326 = vld [vmem:[%s323 + $0x10] sm:$0xff]
    %v327 = vld [vmem:[%s323 + $0x18] sm:$0xff]
    %v329 = vsel %vm51, %v322, 0
    %331 = vmatprep.subr.mxu0 0.0
    %332 = vmatpush1.msra.mxu0 0.0
    %333 = vmatprep.subr.mxu0 0.0
    %334 = vmatpush1.msra.mxu0 0.0
    %335 = vmatprep.subr.mxu0 0.0
    %336 = vmatpush1.msra.mxu0 0.0
    %337 = vmatprep.subr.mxu0 0.0
    %338 = vmatpush1.msra.mxu0 0.0
    %339 = vmatprep.subr.mxu0 0.0
    %340 = vmatpush1.msra.mxu0 0.0
    %341 = vmatprep.subr.mxu0 0.0
    %342 = vmatpush1.msra.mxu0 0.0
    %343 = vmatprep.subr.mxu0 0.0
    %344 = vmatpush1.msra.mxu0 0.0
    %345 = vmatprep.subr.mxu0 0.0
    %346 = vmatpush1.msra.mxu0 0.0
    %347 = vmatprep.subr.mxu0 0.0
    %348 = vmatpush1.msra.mxu0 0.0
    %349 = vmatprep.subr.mxu0 0.0
    %350 = vmatpush1.msra.mxu0 0.0
    %351 = vmatprep.subr.mxu0 0.0
    %352 = vmatpush1.msra.mxu0 0.0
    %353 = vmatprep.subr.mxu0 0.0
    %354 = vmatpush1.msra.mxu0 0.0
    %355 = vmatprep.subr.mxu0 0.0
    %356 = vmatpush1.msra.mxu0 %v327
    %357 = vmatprep.subr.mxu0 0.0
    %358 = vmatpush1.msra.mxu0 %v326
    %359 = vmatprep.subr.mxu0 0.0
    %360 = vmatpush1.msra.mxu0 %v325
    %361 = vmatprep.subr.mxu0 0.0
    %362 = vmatpush1.msra.mxu0 %v324
    %363 = vmatprep.subr.mxu0 0.0
    %364 = vmatpush2.msra.mxu0 0.0
    %365 = vmatprep.subr.mxu0 0.0
    %366 = vmatpush2.msra.mxu0 0.0
    %367 = vmatprep.subr.mxu0 0.0
    %368 = vmatpush2.msra.mxu0 0.0
    %369 = vmatprep.subr.mxu0 0.0
    %370 = vmatpush2.msra.mxu0 0.0
    %371 = vmatprep.subr.mxu0 0.0
    %372 = vmatpush2.msra.mxu0 0.0
    %373 = vmatprep.subr.mxu0 0.0
    %374 = vmatpush2.msra.mxu0 0.0
    %375 = vmatprep.subr.mxu0 0.0
    %376 = vmatpush2.msra.mxu0 0.0
    %377 = vmatprep.subr.mxu0 0.0
    %378 = vmatpush2.msra.mxu0 0.0
    %379 = vmatprep.subr.mxu0 0.0
    %380 = vmatpush2.msra.mxu0 0.0
    %381 = vmatprep.subr.mxu0 0.0
    %382 = vmatpush2.msra.mxu0 0.0
    %383 = vmatprep.subr.mxu0 0.0
    %384 = vmatpush2.msra.mxu0 0.0
    %385 = vmatprep.subr.mxu0 0.0
    %386 = vmatpush2.msra.mxu0 0.0
    %387 = vmatprep.subr.mxu0 0.0
    %388 = vmatpush2.msra.mxu0 0.0
    %389 = vmatprep.subr.mxu0 0.0
    %390 = vmatpush2.msra.mxu0 0.0
    %391 = vmatprep.subr.mxu0 0.0
    %392 = vmatpush2.msra.mxu0 0.0
    %393 = vmatprep.subr.mxu0 0.0
    %394 = vmatpush2.msra.mxu0 0.0
    %395 = vmatprep.mubr.f32.mxu0 0.0
    %396 = vmatmul.mubr.f32.gmra.mxu0 %v329
    %v397 = vpop.f32.mrf.mxu0
    %v398 = vadd.f32 0.0, %v397
    %v399 = vpop.f32.mrf.mxu0
    %400 = vdwg.mxu0
    %v401 = vsel %vm51, %v308, 0
    %403 = vmatprep.subr.mxu0 0.0
    %404 = vmatpush1.msra.mxu0 0.0
    %405 = vmatprep.subr.mxu0 0.0
    %406 = vmatpush1.msra.mxu0 0.0
    %407 = vmatprep.subr.mxu0 0.0
    %408 = vmatpush1.msra.mxu0 0.0
    %409 = vmatprep.subr.mxu0 0.0
    %410 = vmatpush1.msra.mxu0 0.0
    %411 = vmatprep.subr.mxu0 0.0
    %412 = vmatpush1.msra.mxu0 0.0
    %413 = vmatprep.subr.mxu0 0.0
    %414 = vmatpush1.msra.mxu0 0.0
    %415 = vmatprep.subr.mxu0 0.0
    %416 = vmatpush1.msra.mxu0 0.0
    %417 = vmatprep.subr.mxu0 0.0
    %418 = vmatpush1.msra.mxu0 0.0
    %419 = vmatprep.subr.mxu0 0.0
    %420 = vmatpush1.msra.mxu0 0.0
    %421 = vmatprep.subr.mxu0 0.0
    %422 = vmatpush1.msra.mxu0 0.0
    %423 = vmatprep.subr.mxu0 0.0
    %424 = vmatpush1.msra.mxu0 0.0
    %425 = vmatprep.subr.mxu0 0.0
    %426 = vmatpush1.msra.mxu0 0.0
    %427 = vmatprep.subr.mxu0 0.0
    %428 = vmatpush1.msra.mxu0 %v320
    %429 = vmatprep.subr.mxu0 0.0
    %430 = vmatpush1.msra.mxu0 %v319
    %431 = vmatprep.subr.mxu0 0.0
    %432 = vmatpush1.msra.mxu0 %v318
    %433 = vmatprep.subr.mxu0 0.0
    %434 = vmatpush1.msra.mxu0 %v317
    %435 = vmatprep.subr.mxu0 0.0
    %436 = vmatpush2.msra.mxu0 0.0
    %437 = vmatprep.subr.mxu0 0.0
    %438 = vmatpush2.msra.mxu0 0.0
    %439 = vmatprep.subr.mxu0 0.0
    %440 = vmatpush2.msra.mxu0 0.0
    %441 = vmatprep.subr.mxu0 0.0
    %442 = vmatpush2.msra.mxu0 0.0
    %443 = vmatprep.subr.mxu0 0.0
    %444 = vmatpush2.msra.mxu0 0.0
    %445 = vmatprep.subr.mxu0 0.0
    %446 = vmatpush2.msra.mxu0 0.0
    %447 = vmatprep.subr.mxu0 0.0
    %448 = vmatpush2.msra.mxu0 0.0
    %449 = vmatprep.subr.mxu0 0.0
    %450 = vmatpush2.msra.mxu0 0.0
    %451 = vmatprep.subr.mxu0 0.0
    %452 = vmatpush2.msra.mxu0 0.0
    %453 = vmatprep.subr.mxu0 0.0
    %454 = vmatpush2.msra.mxu0 0.0
    %455 = vmatprep.subr.mxu0 0.0
    %456 = vmatpush2.msra.mxu0 0.0
    %457 = vmatprep.subr.mxu0 0.0
    %458 = vmatpush2.msra.mxu0 0.0
    %459 = vmatprep.subr.mxu0 0.0
    %460 = vmatpush2.msra.mxu0 0.0
    %461 = vmatprep.subr.mxu0 0.0
    %462 = vmatpush2.msra.mxu0 0.0
    %463 = vmatprep.subr.mxu0 0.0
    %464 = vmatpush2.msra.mxu0 0.0
    %465 = vmatprep.subr.mxu0 0.0
    %466 = vmatpush2.msra.mxu0 0.0
    %467 = vmatprep.mubr.f32.mxu0 0.0
    %468 = vmatmul.mubr.f32.gmra.mxu0 %v401
    %v469 = vpop.f32.mrf.mxu0
    %v470 = vadd.f32 %v398, %v469
    %v471 = vpop.f32.mrf.mxu0
    %472 = vdwg.mxu0
    %s473 = scalar_lea.vmem %s3, 1
    %v474 = vld [vmem:[%s473] sm:$0x1]
    %v476 = vlaneseq
    %v477 = vshrl.u32 %v476, 7
    %v478 = vsub.s32 0, %v477
    %v479 = vrot.slane %v474, %v478
    %v481 = vadd.f32 %v470, %v479
    %s482 = scalar_lea.vmem [#allocation3], 8
    %v483 = vld [vmem:[%s482] sm:$0xff]
    %v484 = vxor.u32 %v481, 2147483648
    %v485 = vmul.f32 %v484, 1.442695
    %v486 = vpow.pop %v485
    %v487 = vadd.f32 %v486, 1.0
    %v488 = vrcp.pop %v487
    %v489 = vmul.f32 1.0, %v488
    %v490 = vtanh.pop %v481
    %492 = vrot.lane.b32.xlu0 %v483, 32
    %v493 = vpop.permute.xlu0 %492
    %v495 = vmul.f32 %v489, %v493
    %497 = vrot.lane.b32.xlu0 %v490, 64
    %v498 = vpop.permute.xlu0 %497
    %v500 = vmul.f32 %v489, %v498
    %502 = vrot.lane.b32.xlu0 %v500, 32
    %v503 = vpop.permute.xlu0 %502
    %v505 = vadd.f32 %v495, %v503
    %v506 = vtanh.pop %v505
    %508 = vrot.lane.b32.xlu0 %v506, 64
    %v509 = vpop.permute.xlu0 %508
    %v511 = vmul.f32 %v489, %v509
    %513 = vrot.lane.b32.xlu0 %v511, 32
    %v514 = vpop.permute.xlu0 %513
    %516 = vst.msk [vmem:[%s321] sm:$0xff] %vm51, %v514
    %518 = vrot.lane.b32.xlu0 %v505, 96
    %v519 = vpop.permute.xlu0 %518
    %521 = vst.msk [vmem:[%s482] sm:$0xff] %vm51, %v519
    %s522 = scalar_lea.vmem [#allocation5], %s195
    %523 = vst.msk [vmem:[%s522] sm:$0xff] %vm51, %v514
  $region34: #{tpu_custom_call.1} parent=0 // loop_footer
    %s194 = sadd.s32 1, %s190
  $region35: #{tpu_custom_call.1} parent=0 // loop_footer_branch
    %189 = sbr.rel target = $region31
  $region36: #{tpu_custom_call.1} parent=0 // loop_exit
    _
  %v524 = vld [vmem:[#allocation5] sm:$0xff]
  %v525 = vld [vmem:[#allocation5 + $0x8] sm:$0xff]
  %v526 = vld [vmem:[#allocation5 + $0x10] sm:$0xff]
  %v527 = vld [vmem:[#allocation5 + $0x18] sm:$0xff]
  %v528 = vld [vmem:[#allocation5 + $0x20] sm:$0xff]
  %v529 = vld [vmem:[#allocation5 + $0x28] sm:$0xff]
  %v530 = vld [vmem:[#allocation5 + $0x30] sm:$0xff]
  %v531 = vld [vmem:[#allocation5 + $0x38] sm:$0xff]
  %v532 = vld [vmem:[%s4] sm:$0xff]
  %v533 = vld [vmem:[%s4 + $0x8] sm:$0xff]
  %v534 = vld [vmem:[%s4 + $0x10] sm:$0xff]
  %v535 = vld [vmem:[%s4 + $0x18] sm:$0xff]
  %v536 = vld [vmem:[%s5] sm:$0x1]
  %v538 = vlaneseq
  %v539 = vshrl.u32 %v538, 7
  %v540 = vsub.s32 0, %v539
  %v541 = vrot.slane %v536, %v540
  %v544 = vsel %vm51, %v524, 0
  %v547 = vsel %vm51, %v525, 0
  %v550 = vsel %vm51, %v526, 0
  %v553 = vsel %vm51, %v527, 0
  %v556 = vsel %vm51, %v528, 0
  %v559 = vsel %vm51, %v529, 0
  %v562 = vsel %vm51, %v530, 0
  %v565 = vsel %vm51, %v531, 0
  %567 = vmatprep.subr.mxu0 0.0
  %568 = vmatpush1.msra.mxu0 0.0
  %569 = vmatprep.subr.mxu0 0.0
  %570 = vmatpush1.msra.mxu0 0.0
  %571 = vmatprep.subr.mxu0 0.0
  %572 = vmatpush1.msra.mxu0 0.0
  %573 = vmatprep.subr.mxu0 0.0
  %574 = vmatpush1.msra.mxu0 0.0
  %575 = vmatprep.subr.mxu0 0.0
  %576 = vmatpush1.msra.mxu0 0.0
  %577 = vmatprep.subr.mxu0 0.0
  %578 = vmatpush1.msra.mxu0 0.0
  %579 = vmatprep.subr.mxu0 0.0
  %580 = vmatpush1.msra.mxu0 0.0
  %581 = vmatprep.subr.mxu0 0.0
  %582 = vmatpush1.msra.mxu0 0.0
  %583 = vmatprep.subr.mxu0 0.0
  %584 = vmatpush1.msra.mxu0 0.0
  %585 = vmatprep.subr.mxu0 0.0
  %586 = vmatpush1.msra.mxu0 0.0
  %587 = vmatprep.subr.mxu0 0.0
  %588 = vmatpush1.msra.mxu0 0.0
  %589 = vmatprep.subr.mxu0 0.0
  %590 = vmatpush1.msra.mxu0 0.0
  %591 = vmatprep.subr.mxu0 0.0
  %592 = vmatpush1.msra.mxu0 %v535
  %593 = vmatprep.subr.mxu0 0.0
  %594 = vmatpush1.msra.mxu0 %v534
  %595 = vmatprep.subr.mxu0 0.0
  %596 = vmatpush1.msra.mxu0 %v533
  %597 = vmatprep.subr.mxu0 0.0
  %598 = vmatpush1.msra.mxu0 %v532
  %599 = vmatprep.subr.mxu0 0.0
  %600 = vmatpush2.msra.mxu0 0.0
  %601 = vmatprep.subr.mxu0 0.0
  %602 = vmatpush2.msra.mxu0 0.0
  %603 = vmatprep.subr.mxu0 0.0
  %604 = vmatpush2.msra.mxu0 0.0
  %605 = vmatprep.subr.mxu0 0.0
  %606 = vmatpush2.msra.mxu0 0.0
  %607 = vmatprep.subr.mxu0 0.0
  %608 = vmatpush2.msra.mxu0 0.0
  %609 = vmatprep.subr.mxu0 0.0
  %610 = vmatpush2.msra.mxu0 0.0
  %611 = vmatprep.subr.mxu0 0.0
  %612 = vmatpush2.msra.mxu0 0.0
  %613 = vmatprep.subr.mxu0 0.0
  %614 = vmatpush2.msra.mxu0 0.0
  %615 = vmatprep.subr.mxu0 0.0
  %616 = vmatpush2.msra.mxu0 0.0
  %617 = vmatprep.subr.mxu0 0.0
  %618 = vmatpush2.msra.mxu0 0.0
  %619 = vmatprep.subr.mxu0 0.0
  %620 = vmatpush2.msra.mxu0 0.0
  %621 = vmatprep.subr.mxu0 0.0
  %622 = vmatpush2.msra.mxu0 0.0
  %623 = vmatprep.subr.mxu0 0.0
  %624 = vmatpush2.msra.mxu0 0.0
  %625 = vmatprep.subr.mxu0 0.0
  %626 = vmatpush2.msra.mxu0 0.0
  %627 = vmatprep.subr.mxu0 0.0
  %628 = vmatpush2.msra.mxu0 0.0
  %629 = vmatprep.subr.mxu0 0.0
  %630 = vmatpush2.msra.mxu0 0.0
  %631 = vmatprep.mubr.f32.mxu0 0.0
  %632 = vmatmul.mubr.f32.gmra.mxu0 %v544
  %v633 = vpop.f32.mrf.mxu0
  %v634 = vadd.f32 %v541, %v633
  %v635 = vpop.f32.mrf.mxu0
  %636 = vmatprep.mubr.f32.mxu0 0.0
  %637 = vmatmul.mubr.f32.gmra.mxu0 %v547
  %v638 = vpop.f32.mrf.mxu0
  %v639 = vadd.f32 %v541, %v638
  %v640 = vpop.f32.mrf.mxu0
  %641 = vmatprep.mubr.f32.mxu0 0.0
  %642 = vmatmul.mubr.f32.gmra.mxu0 %v550
  %v643 = vpop.f32.mrf.mxu0
  %v644 = vadd.f32 %v541, %v643
  %v645 = vpop.f32.mrf.mxu0
  %646 = vmatprep.mubr.f32.mxu0 0.0
  %647 = vmatmul.mubr.f32.gmra.mxu0 %v553
  %v648 = vpop.f32.mrf.mxu0
  %v649 = vadd.f32 %v541, %v648
  %v650 = vpop.f32.mrf.mxu0
  %651 = vmatprep.mubr.f32.mxu0 0.0
  %652 = vmatmul.mubr.f32.gmra.mxu0 %v556
  %v653 = vpop.f32.mrf.mxu0
  %v654 = vadd.f32 %v541, %v653
  %v655 = vpop.f32.mrf.mxu0
  %656 = vmatprep.mubr.f32.mxu0 0.0
  %657 = vmatmul.mubr.f32.gmra.mxu0 %v559
  %v658 = vpop.f32.mrf.mxu0
  %v659 = vadd.f32 %v541, %v658
  %v660 = vpop.f32.mrf.mxu0
  %661 = vmatprep.mubr.f32.mxu0 0.0
  %662 = vmatmul.mubr.f32.gmra.mxu0 %v562
  %v663 = vpop.f32.mrf.mxu0
  %v664 = vadd.f32 %v541, %v663
  %v665 = vpop.f32.mrf.mxu0
  %666 = vmatprep.mubr.f32.mxu0 0.0
  %667 = vmatmul.mubr.f32.gmra.mxu0 %v565
  %v668 = vpop.f32.mrf.mxu0
  %v669 = vadd.f32 %v541, %v668
  %v670 = vpop.f32.mrf.mxu0
  %671 = vdwg.mxu0
  %vm672 = vcmask 64512
  %673 = vst.msk [vmem:[%s6] sm:$0xff] %vm672, %v634
  %674 = vst.msk [vmem:[%s6 + $0x8] sm:$0xff] %vm672, %v639
  %675 = vst.msk [vmem:[%s6 + $0x10] sm:$0xff] %vm672, %v644
  %676 = vst.msk [vmem:[%s6 + $0x18] sm:$0xff] %vm672, %v649
  %677 = vst.msk [vmem:[%s6 + $0x20] sm:$0xff] %vm672, %v654
  %678 = vst.msk [vmem:[%s6 + $0x28] sm:$0xff] %vm672, %v659
  %679 = vst.msk [vmem:[%s6 + $0x30] sm:$0xff] %vm672, %v664
  %680 = vst.msk [vmem:[%s6 + $0x38] sm:$0xff] %vm672, %v669
  // Predicated region
  $region37: #{tpu_custom_call.1} parent=0 // pred_check
    _
  $region38: #{tpu_custom_call.1} parent=0 // pred_check_branch
    %682 = sbr.rel (0) target = $region40
  $region39: #{tpu_custom_call.1} parent=0 // pred_region
    _
  $region40: #{tpu_custom_call.1} parent=0 // pred_fallthru
    _
  // Predicated region
  $region41: #{tpu_custom_call.1} parent=0 // pred_check
    _
  $region42: #{tpu_custom_call.1} parent=0 // pred_check_branch
    %684 = sbr.rel (0) target = $region44
  $region43: #{tpu_custom_call.1} parent=0 // pred_region
    _
  $region44: #{tpu_custom_call.1} parent=0 // pred_fallthru
    _

</llo_original>
